<compile_context>
chip_gen: v7x
topology: tpu7x:2x2x1
jax: 0.10.0
libtpu: 0.0.40
codegen_flags: <defaults>
</compile_context>

<pallas_src>
import functools
import math

import jax
import jax.numpy as jnp
from jax import lax
from jax.experimental import pallas as pl
from jax.experimental.pallas import tpu as pltpu


def make_pos_embedding(emb_size: int, maxlen: int) -> jnp.ndarray:
    """Replicates the buffer built in PositionalEncoding.__init__ -> (maxlen, 1, emb)."""
    den = jnp.exp(
        -jnp.arange(0, emb_size, 2, dtype=jnp.float32) * math.log(10000.0) / emb_size
    )
    pos = jnp.arange(0, maxlen, dtype=jnp.float32).reshape(maxlen, 1)
    pe = jnp.zeros((maxlen, emb_size), dtype=jnp.float32)
    pe = pe.at[:, 0::2].set(jnp.sin(pos * den))
    pe = pe.at[:, 1::2].set(jnp.cos(pos * den))
    return pe[:, None, :]  # (maxlen, 1, emb)


def _pick_seq_tile(S: int, row_bytes: int, target_bytes: int = 2 << 20) -> int:
    """Largest multiple-of-8 divisor of S whose x tile stays <= target_bytes.

    ~2 MiB tiles reach ~85% of HBM roofline with double-buffering while the
    full footprint (2*(in+out)+pe) stays under every chip's scoped VMEM limit.
    """
    div8 = [d for d in range(8, S + 1, 8) if S % d == 0]
    if not div8:
        return S  # full-extent block is always layout-legal (small-S fallback)
    fitting = [d for d in div8 if d * row_bytes <= target_bytes]
    return max(fitting) if fitting else min(div8)


def _hash_keep_mask(seed_u32, base_row, n_rows, n_cols, thresh):
    """Stateless Bernoulli(keep) mask from a murmur3-style finalizer over the
    absolute element index -> same mask for any seq_tile; portable jnp ops only."""
    rows = lax.broadcasted_iota(jnp.int32, (n_rows, n_cols), 0) + base_row
    cols = lax.broadcasted_iota(jnp.int32, (n_rows, n_cols), 1)
    h = (rows * n_cols + cols).astype(jnp.uint32)
    h = h * jnp.uint32(0x9E3779B1) + seed_u32
    h = h ^ (h >> 16)
    h = h * jnp.uint32(0x7FEB352D)
    h = h ^ (h >> 15)
    h = h * jnp.uint32(0x846CA68B)
    h = h ^ (h >> 16)
    # floor(keep_prob * 2^32) threshold -> <= 2^-32 bias in keep prob (negligible).
    return h < jnp.uint32(thresh)


def _pe_kernel(seed_ref, x_ref, pe_ref, o_ref, *, batch, seq_tile, dropout_p, thresh):
    # x_ref: (seq_tile, B*E) in the model dtype; pe_ref: (seq_tile, E) f32.
    x = x_ref[...].astype(jnp.float32)
    pe = jnp.tile(pe_ref[...], (1, batch))  # broadcast positional row across batch
    y = x + pe
    if dropout_p > 0.0:
        keep_prob = 1.0 - dropout_p
        base_row = pl.program_id(0) * seq_tile
        keep = _hash_keep_mask(
            seed_ref[0].astype(jnp.uint32), base_row, y.shape[0], y.shape[1], thresh
        )
        y = jnp.where(keep, y * jnp.float32(1.0 / keep_prob), jnp.float32(0.0))
    o_ref[...] = y.astype(o_ref.dtype)


def positional_encoding(
    token_embedding: jnp.ndarray,   # (S, B, E) float32 / bfloat16
    pos_embedding: jnp.ndarray,     # (maxlen, 1, E) float32
    *,
    dropout_p: float,
    seed: int = 0,
    seq_tile: int | None = None,
) -> jnp.ndarray:
    S, B, E = token_embedding.shape
    maxlen = pos_embedding.shape[0]
    assert S <= maxlen
    assert 0.0 <= dropout_p <= 1.0

    if dropout_p >= 1.0:
        # nn.Dropout(p=1) zeroes everything; avoid 1/keep_prob = 1/0.
        return jnp.zeros_like(token_embedding)

    out_dtype = token_embedding.dtype
    BE = B * E
    x2d = token_embedding.reshape(S, BE)                 # lane-dense last dim
    pe2d = pos_embedding[:S, 0, :].astype(jnp.float32)   # (S, E)

    row_bytes = BE * jnp.dtype(out_dtype).itemsize
    if seq_tile is None:
        seq_tile = _pick_seq_tile(S, row_bytes)
    assert S % seq_tile == 0
    grid = (S // seq_tile,)

    keep_prob = 1.0 - float(dropout_p)
    thresh = min(int(keep_prob * (2 ** 32)), 2 ** 32 - 1)

    kernel = functools.partial(
        _pe_kernel,
        batch=B,
        seq_tile=seq_tile,
        dropout_p=float(dropout_p),
        thresh=thresh,
    )

    # Double-buffered in+out tiles + pe tiles, with headroom; clamp to 32 MiB so
    # it is valid on v5e/v6e/v7x scoped VMEM.
    x_tile_bytes = seq_tile * row_bytes
    pe_tile_bytes = seq_tile * E * 4
    vmem_limit = int(min(max(4 * (2 * x_tile_bytes + pe_tile_bytes), 16 << 20), 32 << 20))

    grid_spec = pltpu.PrefetchScalarGridSpec(
        num_scalar_prefetch=1,
        grid=grid,
        in_specs=[
            pl.BlockSpec((seq_tile, BE), lambda i, seed_ref: (i, 0)),  # x tile
            pl.BlockSpec((seq_tile, E), lambda i, seed_ref: (i, 0)),   # pe tile
        ],
        out_specs=pl.BlockSpec((seq_tile, BE), lambda i, seed_ref: (i, 0)),
    )

    seed_arr = jnp.array([seed], dtype=jnp.int32)

    out2d = pl.pallas_call(
        kernel,
        out_shape=jax.ShapeDtypeStruct((S, BE), out_dtype),
        grid_spec=grid_spec,
        compiler_params=pltpu.CompilerParams(
            # Stateless per-element RNG -> no cross-step carry; "parallel" lets
            # v7x shard the seq grid across both TensorCores (free on v5e/v6e).
            dimension_semantics=("parallel",),
            vmem_limit_bytes=vmem_limit,
        ),
    )(seed_arr, x2d, pe2d)

    return out2d.reshape(S, B, E)


if __name__ == "__main__":
    # Small shapes consistent with the module: (seq, batch, emb)
    SEQ, BATCH, EMB = 8, 2, 32
    MAXLEN = 64
    DROPOUT = 0.1

    key = jax.random.PRNGKey(0)
    x = jax.random.normal(key, (SEQ, BATCH, EMB), dtype=jnp.float32)
    pos_embedding = make_pos_embedding(EMB, MAXLEN)

    # Training-mode run (with dropout).
    out = jax.block_until_ready(
        positional_encoding(x, pos_embedding, dropout_p=DROPOUT, seed=0)
    )
    assert out.shape == (SEQ, BATCH, EMB)

    # Eval-mode (no dropout) must match the plain-JAX reference.
    out_eval = jax.block_until_ready(
        positional_encoding(x, pos_embedding, dropout_p=0.0, seed=0)
    )
    ref = x + pos_embedding[:SEQ]
    assert jnp.allclose(out_eval, ref, atol=1e-6), "eval-mode mismatch vs reference"

    # Dropout semantics: every output element is either 0 or ref / keep_prob.
    keep_prob = 1.0 - DROPOUT
    kept = out != 0.0
    assert jnp.allclose(
        jnp.where(kept, out, 0.0),
        jnp.where(kept, ref / keep_prob, 0.0),
        rtol=1e-5,
        atol=1e-5,
    ), "dropout scaling mismatch"

    print("KERNEL_OK")
</pallas_src>

<mosaic_0001>
module attributes {stable_mosaic.version = 11 : i64} {
  func.func @_pe_kernel(%arg0: i32, %arg1: memref<1xi32, #tpu.memory_space<smem>>, %arg2: memref<8x64xf32, #tpu.memory_space<vmem>>, %arg3: memref<8x32xf32, #tpu.memory_space<vmem>>, %arg4: memref<8x64xf32, #tpu.memory_space<vmem>>) attributes {dimension_semantics = [#tpu.dimension_semantics<parallel>], iteration_bounds = array<i64: 1>, scalar_prefetch = 1 : i64, scratch_operands = 0 : i64, tpu.core_type = #tpu.core_type<tc>, window_params = [{transform_indices = @transform_0, window_bounds = array<i64: 8, 64>}, {transform_indices = @transform_1, window_bounds = array<i64: 8, 32>}, {transform_indices = @transform_2, window_bounds = array<i64: 8, 64>}]} {
    %c0 = arith.constant 0 : index
    %c0_0 = arith.constant 0 : index
    %0 = vector.load %arg2[%c0, %c0_0] : memref<8x64xf32, #tpu.memory_space<vmem>>, vector<8x64xf32>
    %c0_1 = arith.constant 0 : index
    %c0_2 = arith.constant 0 : index
    %1 = vector.load %arg3[%c0_1, %c0_2] : memref<8x32xf32, #tpu.memory_space<vmem>>, vector<8x32xf32>
    %2 = tpu.concatenate %1, %1 in 1 : vector<8x32xf32>, vector<8x32xf32> -> vector<8x64xf32>
    %3 = arith.addf %0, %2 : vector<8x64xf32>
    %c8_i32 = arith.constant 8 : i32
    %4 = arith.muli %arg0, %c8_i32 : i32
    %c0_3 = arith.constant 0 : index
    %5 = memref.load %arg1[%c0_3] : memref<1xi32, #tpu.memory_space<smem>>
    %6 = tpu.iota {dimensions = array<i32: 0>} : vector<8x64xi32>
    %7 = vector.broadcast %4 : i32 to vector<8x64xi32>
    %8 = arith.addi %6, %7 : vector<8x64xi32>
    %9 = tpu.iota {dimensions = array<i32: 1>} : vector<8x64xi32>
    %c64_i32 = arith.constant 64 : i32
    %10 = vector.broadcast %c64_i32 : i32 to vector<8x64xi32>
    %11 = arith.muli %8, %10 : vector<8x64xi32>
    %12 = arith.addi %11, %9 : vector<8x64xi32>
    %c-1640531535_i32 = arith.constant -1640531535 : i32
    %13 = vector.broadcast %c-1640531535_i32 : i32 to vector<8x64xi32>
    %14 = arith.muli %12, %13 : vector<8x64xi32>
    %15 = vector.broadcast %5 : i32 to vector<8x64xi32>
    %16 = arith.addi %14, %15 : vector<8x64xi32>
    %c16_i32 = arith.constant 16 : i32
    %17 = vector.broadcast %c16_i32 : i32 to vector<8x64xi32>
    %18 = arith.shrui %16, %17 : vector<8x64xi32>
    %19 = arith.xori %16, %18 : vector<8x64xi32>
    %c2146121005_i32 = arith.constant 2146121005 : i32
    %20 = vector.broadcast %c2146121005_i32 : i32 to vector<8x64xi32>
    %21 = arith.muli %19, %20 : vector<8x64xi32>
    %c15_i32 = arith.constant 15 : i32
    %22 = vector.broadcast %c15_i32 : i32 to vector<8x64xi32>
    %23 = arith.shrui %21, %22 : vector<8x64xi32>
    %24 = arith.xori %21, %23 : vector<8x64xi32>
    %c-2073254261_i32 = arith.constant -2073254261 : i32
    %25 = vector.broadcast %c-2073254261_i32 : i32 to vector<8x64xi32>
    %26 = arith.muli %24, %25 : vector<8x64xi32>
    %c16_i32_4 = arith.constant 16 : i32
    %27 = vector.broadcast %c16_i32_4 : i32 to vector<8x64xi32>
    %28 = arith.shrui %26, %27 : vector<8x64xi32>
    %29 = arith.xori %26, %28 : vector<8x64xi32>
    %c-429496730_i32 = arith.constant -429496730 : i32
    %30 = vector.broadcast %c-429496730_i32 : i32 to vector<8x64xi32>
    %31 = arith.cmpi ult, %29, %30 : vector<8x64xi32>
    %cst = arith.constant 1.11111116 : f32
    %32 = vector.broadcast %cst : f32 to vector<8x64xf32>
    %33 = arith.mulf %3, %32 : vector<8x64xf32>
    %cst_5 = arith.constant 0.000000e+00 : f32
    %34 = vector.broadcast %cst_5 : f32 to vector<8x64xf32>
    %35 = arith.select %31, %33, %34 : vector<8x64xi1>, vector<8x64xf32>
    %c0_6 = arith.constant 0 : index
    %c0_7 = arith.constant 0 : index
    %36 = vector.load %arg4[%c0_6, %c0_7] : memref<8x64xf32, #tpu.memory_space<vmem>>, vector<8x64xf32>
    tpu.vector_store %arg4[%c0_6, %c0_7], %35 {strides = array<i32>} : memref<8x64xf32, #tpu.memory_space<vmem>>, vector<8x64xf32>,
    return
  }
  func.func @transform_0(%arg0: i32, %arg1: memref<1xi32, #tpu.memory_space<smem>>) -> (i32, i32) {
    %c0_i32 = arith.constant 0 : i32
    %c0_i32_0 = arith.constant 0 : i32
    return %arg0, %c0_i32 : i32, i32
  }
  func.func @transform_1(%arg0: i32, %arg1: memref<1xi32, #tpu.memory_space<smem>>) -> (i32, i32) {
    %c0_i32 = arith.constant 0 : i32
    %c0_i32_0 = arith.constant 0 : i32
    return %arg0, %c0_i32 : i32, i32
  }
  func.func @transform_2(%arg0: i32, %arg1: memref<1xi32, #tpu.memory_space<smem>>) -> (i32, i32) {
    %c0_i32 = arith.constant 0 : i32
    %c0_i32_0 = arith.constant 0 : i32
    return %arg0, %c0_i32 : i32, i32
  }
}

</mosaic_0001>

<llo_original>
// kernel: tpu_custom_call.1
$region0: #{tpu_custom_call.1}
  #allocation0 [shape = 'u32[]', space=smem, size = 0x4, offset = 0x4, fixed_abs, tag = 'smem constant byte address 0x4 - core index']
  #allocation1 [shape = 'u32[144,128]{1,0:T(1,128)}', space=vmem, size = 0x12000, scoped, tag = 'internal scratch']
  #allocation2 [shape = 's32[1]{0}', space=sflag, size = 0x4, scoped, tag = 'scoped memory for tpu_custom_call.1']
  #allocation3 [shape = 's32[1]{0:T(128)S(6)}', space=smem, size = 0x200, scoped, tag = 'prefetched SMEM operand 0']
  %s0 = inlined_call_operand.<no memory space> [shape: s32[1], index: 0, kind: input, shape index: {}]
  %s1 = inlined_call_operand.hbm [shape: f32[8,64], index: 1, kind: input, shape index: {}]
  %s2 = inlined_call_operand.hbm [shape: f32[8,32], index: 2, kind: input, shape index: {}]
  %s3 = inlined_call_operand.hbm [shape: f32[8,64], index: 3, kind: output, shape index: {}]
  %s4 = sld [smem:[#allocation0]]
  $region26: #{tpu_custom_call.1} parent=0
    _
  %s6 = ssub.s32 1, %s4
  %s7 = scalar_select 0, %s6, %s4
  %8 = sst [smem:[#allocation3]] %s0
  $region1: #{tpu_custom_call.1} parent=0
    #allocation4 [shape = 'u8[4096]{0}', space=vmem, size = 0x1000, scoped, tag = 'input window, operand 1, single buffered']
    #allocation5 [shape = 's32[1]{0}', space=sflag, size = 0x4, scoped, tag = 'scoped memory for tpu_custom_call.1']
    #allocation6 [shape = 's32[1]{0}', space=sflag, size = 0x4, scoped, tag = 'scoped memory for tpu_custom_call.1']
    #allocation7 [shape = 'u8[4096]{0}', space=vmem, size = 0x1000, scoped, tag = 'input window, operand 2, single buffered']
    #allocation8 [shape = 's32[1]{0}', space=sflag, size = 0x4, scoped, tag = 'scoped memory for tpu_custom_call.1']
    #allocation9 [shape = 'u8[4096]{0}', space=vmem, size = 0x1000, scoped, tag = 'output window, operand 0, single buffered']
    %9 = vsyncpa [#allocation5], 0
    %10 = vsyncpa [#allocation8], 0
    %11 = vsyncpa [#allocation6], 0
    // Predicated region
    $region2: #{tpu_custom_call.1} parent=1 // pred_check
      _
    $region3: #{tpu_custom_call.1} parent=1 // pred_check_branch
      %13 = sbr.rel (0) target = $region5
    $region4: #{tpu_custom_call.1} parent=1 // pred_region
      %s15 = ssub.s32 128, 128
      %16 = vsyncadd [#allocation5], %s15
      %s18 = sshll.u32 [#allocation4], 4
      %s19 = int_to_ptr.vmem [resolvable:$true] %s18
      %21 = dma.hbm_to_vmem [thread:$0]  %s1, 128, %s19, [#allocation5]
    $region5: #{tpu_custom_call.1} parent=1 // pred_fallthru
      _
    // Predicated region
    $region6: #{tpu_custom_call.1} parent=1 // pred_check
      _
    $region7: #{tpu_custom_call.1} parent=1 // pred_check_branch
      %23 = sbr.rel (0) target = $region9
    $region8: #{tpu_custom_call.1} parent=1 // pred_region
      %s25 = ssub.s32 128, 128
      %26 = vsyncadd [#allocation8], %s25
      %s28 = sshll.u32 [#allocation7], 4
      %s29 = int_to_ptr.vmem [resolvable:$true] %s28
      %31 = dma.hbm_to_vmem [thread:$0]  %s2, 128, %s29, [#allocation8]
    $region9: #{tpu_custom_call.1} parent=1 // pred_fallthru
      _
    // Predicated region
    $region10: #{tpu_custom_call.1} parent=1 // pred_check
      _
    $region11: #{tpu_custom_call.1} parent=1 // pred_check_branch
      %33 = sbr.rel (0) target = $region13
    $region12: #{tpu_custom_call.1} parent=1 // pred_region
      %34 = dma.done [#allocation5], 128
    $region13: #{tpu_custom_call.1} parent=1 // pred_fallthru
      _
    // Predicated region
    $region14: #{tpu_custom_call.1} parent=1 // pred_check
      _
    $region15: #{tpu_custom_call.1} parent=1 // pred_check_branch
      %36 = sbr.rel (0) target = $region17
    $region16: #{tpu_custom_call.1} parent=1 // pred_region
      %37 = dma.done [#allocation8], 128
    $region17: #{tpu_custom_call.1} parent=1 // pred_fallthru
      _
    %v38 = vld [vmem:[#allocation4] sm:$0xff]
    %v39 = vld [vmem:[#allocation7] sm:$0xff]
    %41 = vrot.lane.b32.xlu0 %v39, 32
    %v42 = vpop.permute.xlu0 %41
    %vm44 = vcmask 261120
    %v45 = vsel %vm44, %v39, %v42
    %v46 = vadd.f32 %v38, %v45
    %s47 = smul.u32 0, 8
    %s48 = sld [smem:[#allocation3]]
    %v49 = vlaneseq
    %v50 = vshrl.u32 %v49, 7
    %v51 = vstv %s47
    %v52 = vadd.s32 %v50, %v51
    %v53 = vlaneseq
    %v54 = vand.u32 %v53, 127
    %v55 = vmul.u32 %v52, 64
    %v56 = vadd.s32 %v55, %v54
    %v57 = vmul.u32 %v56, 2654435761
    %v58 = vstv %s48
    %v59 = vadd.s32 %v57, %v58
    %v60 = vshrl.u32 %v59, 16
    %v61 = vxor.u32 %v59, %v60
    %v62 = vmul.u32 %v61, 2146121005
    %v63 = vshrl.u32 %v62, 15
    %v64 = vxor.u32 %v62, %v63
    %v65 = vmul.u32 %v64, 2221713035
    %v66 = vshrl.u32 %v65, 16
    %v67 = vxor.u32 %v65, %v66
    %vm68 = vcmp.lt.u32.totalorder %v67, 3865470566
    %v69 = vmul.f32 %v46, 1.1111112
    %v70 = vsel %vm68, %v69, 0.0
    %vm71 = vcmask 523264
    %72 = vst.msk [vmem:[#allocation9] sm:$0xff] %vm71, %v70
    // Predicated region
    $region18: #{tpu_custom_call.1} parent=1 // pred_check
      _
    $region19: #{tpu_custom_call.1} parent=1 // pred_check_branch
      %74 = sbr.rel (0) target = $region21
    $region20: #{tpu_custom_call.1} parent=1 // pred_region
      %s76 = ssub.s32 128, 128
      %77 = vsyncadd [#allocation6], %s76
      %s79 = sshll.u32 [#allocation9], 4
      %s80 = int_to_ptr.vmem [resolvable:$true] %s79
      %82 = dma.vmem_to_hbm [thread:$0]  %s80, 128, %s3, [#allocation6]
    $region21: #{tpu_custom_call.1} parent=1 // pred_fallthru
      _
    // Predicated region
    $region22: #{tpu_custom_call.1} parent=1 // pred_check
      _
    $region23: #{tpu_custom_call.1} parent=1 // pred_check_branch
      %84 = sbr.rel (0) target = $region25
    $region24: #{tpu_custom_call.1} parent=1 // pred_region
      %85 = dma.done [#allocation6], 128
    $region25: #{tpu_custom_call.1} parent=1 // pred_fallthru
      _
    %86 = vsyncpa [#allocation5], 1
    %87 = vsyncpa [#allocation8], 1
    %88 = vsyncpa [#allocation6], 1

</llo_original>
